<compile_context>
chip_gen: v6e
topology: v6e:2x2x1
jax: 0.10.0
libtpu: 0.0.40
codegen_flags: <defaults>
</compile_context>

<pallas_src>
import functools
import math

import jax
import jax.numpy as jnp
from jax import lax
from jax.experimental import pallas as pl
from jax.experimental.pallas import tpu as pltpu

LATENT_DIM = 20
HIDDEN_DIMS = (64, 128, 64)
OUTPUT_DIM = 20
LN_EPS = 1e-5
BN_EPS = 1e-5


def _round_up(x, m):
    return (x + m - 1) // m * m


def _feature_norm(x):
    """LayerNorm statistics over the feature (sublane) axis of a feature-major tile."""
    mu = jnp.mean(x, axis=0, keepdims=True)
    xc = x - mu
    var = jnp.mean(xc * xc, axis=0, keepdims=True)
    return xc * lax.rsqrt(var + LN_EPS)


def drug_combo_kernel(
    a_ref, b_ref,
    wv_ref, bv2_ref,
    w1_ref, b1_ref,
    w2_ref, b2_ref,
    w3_ref, b3_ref,
    w4_ref, b4_ref,
    wg_ref, bg_ref,
    out_ref,
):
    # Feature-major tiles: (latent_dim, tile_b) with the batch on the lane axis.
    # LayerNorm affine is pre-folded into the V projection, so only mean/var remain here.
    s = _feature_norm(a_ref[...]) + _feature_norm(b_ref[...])              # (D, N)

    # Additive baseline == fused representation (single V-projection of the sum, by linearity).
    baseline = (
        jnp.dot(wv_ref[...], s, preferred_element_type=jnp.float32) + bv2_ref[...]
    )                                                                       # (D, N)

    # Residual gate: VPU multiply + sublane reduce instead of an N=1 matmul.
    gate = jax.nn.sigmoid(
        jnp.sum(s * wg_ref[...], axis=0, keepdims=True) + bg_ref[...]
    )                                                                       # (1, N)

    # Predictor MLP: eval-BatchNorm folded into weights; layer 1 composed with the V proj.
    h = jnp.maximum(
        jnp.dot(w1_ref[...], s, preferred_element_type=jnp.float32) + b1_ref[...], 0.0)
    h = jnp.maximum(
        jnp.dot(w2_ref[...], h, preferred_element_type=jnp.float32) + b2_ref[...], 0.0)
    h = jnp.maximum(
        jnp.dot(w3_ref[...], h, preferred_element_type=jnp.float32) + b3_ref[...], 0.0)
    pred = jnp.dot(w4_ref[...], h, preferred_element_type=jnp.float32) + b4_ref[...]

    out_ref[...] = gate * pred + (1.0 - gate) * baseline


def _fold_params(p):
    """Fold LN affine + eval BatchNorm into weights and transpose to feature-major."""
    D = LATENT_DIM
    h1, h2, h3 = HIDDEN_DIMS

    # LayerNorm affine folded into the attention V projection:
    #   (norm(x)*g + b) @ wv + bv == norm(x) @ (diag(g) @ wv) + (b @ wv + bv)
    wv_f = p["ln_g"].reshape(D, 1) * p["wv"]                    # (D, D)
    bv_f = p["ln_b"].reshape(1, D) @ p["wv"] + p["bv"]          # (1, D)
    bv2 = 2.0 * bv_f                                            # bias of  s @ wv_f + 2*bv_f

    def bn_fold(w, b, bn):
        # bn rows: [gamma, beta, running_mean, running_var]
        scale = bn[0:1] / jnp.sqrt(bn[3:4] + BN_EPS)
        return w * scale, b * scale + (bn[1:2] - bn[2:3] * scale)

    w1f, b1f = bn_fold(p["w1"], p["b1"], p["bn1"])
    w2f, b2f = bn_fold(p["w2"], p["b2"], p["bn2"])
    w3f, b3f = bn_fold(p["w3"], p["b3"], p["bn3"])

    # Compose the V projection through MLP layer 1 and the residual gate (linearity of 'add').
    w1c = wv_f @ w1f                                            # (D, h1)
    b1c = bv2 @ w1f + b1f                                       # (1, h1)
    wg_eff = wv_f @ p["wg"]                                     # (D, 1)
    bg_eff = bv2 @ p["wg"] + p["bg"]                            # (1, 1)

    # Feature-major (transposed) weights: y_t = W_t @ x_t + b_col.
    return (
        wv_f.T, bv2.T,                                          # (D, D),  (D, 1)
        w1c.T, b1c.T,                                           # (h1, D), (h1, 1)
        w2f.T, b2f.T,                                           # (h2, h1),(h2, 1)
        w3f.T, b3f.T,                                           # (h3, h2),(h3, 1)
        p["w4"].T, p["b4"].T,                                   # (O, h3), (O, 1)
        wg_eff, bg_eff,                                         # (D, 1),  (1, 1)
    )


@functools.partial(jax.jit, static_argnames=("tile_b",))
def drug_combination_predictor(drug_a, drug_b, params, *, tile_b=512):
    B, D = drug_a.shape
    assert D == LATENT_DIM and drug_b.shape == (B, D)

    folded = _fold_params(params)

    # Batch tile: a multiple of 128 lanes; keep >= 2 parallel grid steps when the batch
    # is large enough (megacore / v7x two-TensorCore sharding).
    tile = min(_round_up(tile_b, 128), _round_up(B, 128))
    if B >= 256 and _round_up(B, tile) // tile < 2:
        tile = max(128, _round_up(tile // 2, 128))
    b_pad = _round_up(B, tile)
    num_tiles = b_pad // tile

    # Feature-major inputs, zero-padded along the batch (lane) axis.
    a_t = jnp.pad(drug_a.T, ((0, 0), (0, b_pad - B)))
    b_t = jnp.pad(drug_b.T, ((0, 0), (0, b_pad - B)))

    io_spec = pl.BlockSpec((LATENT_DIM, tile), lambda i: (0, i))
    weight_specs = [pl.BlockSpec(w.shape, lambda i: (0, 0)) for w in folded]
    out_spec = pl.BlockSpec((OUTPUT_DIM, tile), lambda i: (0, i))

    out_t = pl.pallas_call(
        drug_combo_kernel,
        out_shape=jax.ShapeDtypeStruct((OUTPUT_DIM, b_pad), jnp.float32),
        grid_spec=pltpu.PrefetchScalarGridSpec(
            num_scalar_prefetch=0,
            grid=(num_tiles,),
            in_specs=[io_spec, io_spec] + weight_specs,
            out_specs=out_spec,
        ),
        compiler_params=pltpu.CompilerParams(
            dimension_semantics=("parallel",),
        ),
    )(a_t, b_t, *folded)

    return out_t[:, :B].T


def init_params(key):
    """Deterministic parameters matching the module's shapes (eval-mode BN buffers)."""
    ks = jax.random.split(key, 32)
    f32 = jnp.float32

    def w(k, shape, fan_in):
        bound = 1.0 / math.sqrt(fan_in)
        return jax.random.uniform(k, shape, f32, -bound, bound)

    def bn(kg, kb, km, kv, dim):
        # rows: [gamma, beta, running_mean, running_var]  (non-trivial, to exercise folding)
        return jnp.stack([
            jax.random.uniform(kg, (dim,), f32, 0.5, 1.5),
            0.1 * jax.random.normal(kb, (dim,), f32),
            0.1 * jax.random.normal(km, (dim,), f32),
            jax.random.uniform(kv, (dim,), f32, 0.5, 1.5),
        ], axis=0)

    h1, h2, h3 = HIDDEN_DIMS
    return {
        # LayerNorm (non-trivial affine so the wrapper-side folding is actually exercised)
        "ln_g": jax.random.uniform(ks[0], (1, LATENT_DIM), f32, 0.5, 1.5),
        "ln_b": 0.1 * jax.random.normal(ks[1], (1, LATENT_DIM), f32),
        # SelfAttention Q/K/V. Q/K are kept for module fidelity but are algebraically dead
        # for seq_len == 1 and are never passed to the kernel.
        "wq": w(ks[2], (LATENT_DIM, LATENT_DIM), LATENT_DIM),
        "bq": jnp.zeros((1, LATENT_DIM), f32),
        "wk": w(ks[3], (LATENT_DIM, LATENT_DIM), LATENT_DIM),
        "bk": jnp.zeros((1, LATENT_DIM), f32),
        "wv": w(ks[4], (LATENT_DIM, LATENT_DIM), LATENT_DIM),
        "bv": w(ks[5], (1, LATENT_DIM), LATENT_DIM),
        # predictor MLP
        "w1": w(ks[6], (LATENT_DIM, h1), LATENT_DIM),
        "b1": w(ks[7], (1, h1), LATENT_DIM),
        "bn1": bn(ks[8], ks[9], ks[10], ks[11], h1),
        "w2": w(ks[12], (h1, h2), h1),
        "b2": w(ks[13], (1, h2), h1),
        "bn2": bn(ks[14], ks[15], ks[16], ks[17], h2),
        "w3": w(ks[18], (h2, h3), h2),
        "b3": w(ks[19], (1, h3), h2),
        "bn3": bn(ks[20], ks[21], ks[22], ks[23], h3),
        "w4": w(ks[24], (h3, OUTPUT_DIM), h3),
        "b4": w(ks[25], (1, OUTPUT_DIM), h3),
        # residual gate
        "wg": w(ks[26], (LATENT_DIM, 1), LATENT_DIM),
        "bg": w(ks[27], (1, 1), LATENT_DIM),
    }


def _reference_forward(drug_a, drug_b, p):
    """Pure-JAX reference with the original (unfolded) parameters."""
    def ln(x):
        mu = x.mean(-1, keepdims=True)
        var = ((x - mu) ** 2).mean(-1, keepdims=True)
        return (x - mu) / jnp.sqrt(var + LN_EPS) * p["ln_g"] + p["ln_b"]

    def attn(x):
        # seq_len == 1 -> softmax over a single key is 1 -> attended == V projection
        return x @ p["wv"] + p["bv"]

    a = attn(ln(drug_a))
    b = attn(ln(drug_b))
    fused = a + b

    def bn(x, bnp):
        return (x - bnp[2:3]) / jnp.sqrt(bnp[3:4] + BN_EPS) * bnp[0:1] + bnp[1:2]

    h = jax.nn.relu(bn(fused @ p["w1"] + p["b1"], p["bn1"]))
    h = jax.nn.relu(bn(h @ p["w2"] + p["b2"], p["bn2"]))
    h = jax.nn.relu(bn(h @ p["w3"] + p["b3"], p["bn3"]))
    pred = h @ p["w4"] + p["b4"]
    gate = jax.nn.sigmoid(fused @ p["wg"] + p["bg"])
    return gate * pred + (1.0 - gate) * fused


if __name__ == "__main__":
    key = jax.random.PRNGKey(0)
    k_a, k_b, k_p = jax.random.split(key, 3)

    B = 8
    drug_a = jax.random.normal(k_a, (B, LATENT_DIM), jnp.float32)
    drug_b = jax.random.normal(k_b, (B, LATENT_DIM), jnp.float32)
    params = init_params(k_p)

    out = jax.block_until_ready(drug_combination_predictor(drug_a, drug_b, params))
    assert out.shape == (B, OUTPUT_DIM)
    assert bool(jnp.all(jnp.isfinite(out)))

    ref = _reference_forward(drug_a, drug_b, params)
    max_err = float(jnp.max(jnp.abs(out - ref)))
    assert jnp.allclose(out, ref, atol=2e-4, rtol=2e-4), f"kernel/reference mismatch: {max_err}"

    # symmetry check: f(a, b) == f(b, a)
    out_swapped = jax.block_until_ready(
        drug_combination_predictor(drug_b, drug_a, params))
    assert jnp.allclose(out, out_swapped, atol=1e-5, rtol=1e-5)

    print("KERNEL_OK")
</pallas_src>

<mosaic_0001>
module attributes {stable_mosaic.version = 11 : i64} {
  func.func @drug_combo_kernel(%arg0: i32, %arg1: memref<20x128xf32, #tpu.memory_space<vmem>>, %arg2: memref<20x128xf32, #tpu.memory_space<vmem>>, %arg3: memref<20x20xf32, #tpu.memory_space<vmem>>, %arg4: memref<20x1xf32, #tpu.memory_space<vmem>>, %arg5: memref<64x20xf32, #tpu.memory_space<vmem>>, %arg6: memref<64x1xf32, #tpu.memory_space<vmem>>, %arg7: memref<128x64xf32, #tpu.memory_space<vmem>>, %arg8: memref<128x1xf32, #tpu.memory_space<vmem>>, %arg9: memref<64x128xf32, #tpu.memory_space<vmem>>, %arg10: memref<64x1xf32, #tpu.memory_space<vmem>>, %arg11: memref<20x64xf32, #tpu.memory_space<vmem>>, %arg12: memref<20x1xf32, #tpu.memory_space<vmem>>, %arg13: memref<20x1xf32, #tpu.memory_space<vmem>>, %arg14: memref<1x1xf32, #tpu.memory_space<vmem>>, %arg15: memref<20x128xf32, #tpu.memory_space<vmem>>) attributes {dimension_semantics = [#tpu.dimension_semantics<parallel>], iteration_bounds = array<i64: 1>, scalar_prefetch = 0 : i64, scratch_operands = 0 : i64, tpu.core_type = #tpu.core_type<tc>, window_params = [{transform_indices = @transform_0, window_bounds = array<i64: 20, 128>}, {transform_indices = @transform_1, window_bounds = array<i64: 20, 128>}, {pipeline_mode = #tpu.pipeline_mode<synchronous>, transform_indices = @transform_2, window_bounds = array<i64: 20, 20>}, {pipeline_mode = #tpu.pipeline_mode<synchronous>, transform_indices = @transform_3, window_bounds = array<i64: 20, 1>}, {pipeline_mode = #tpu.pipeline_mode<synchronous>, transform_indices = @transform_4, window_bounds = array<i64: 64, 20>}, {pipeline_mode = #tpu.pipeline_mode<synchronous>, transform_indices = @transform_5, window_bounds = array<i64: 64, 1>}, {pipeline_mode = #tpu.pipeline_mode<synchronous>, transform_indices = @transform_6, window_bounds = array<i64: 128, 64>}, {pipeline_mode = #tpu.pipeline_mode<synchronous>, transform_indices = @transform_7, window_bounds = array<i64: 128, 1>}, {pipeline_mode = #tpu.pipeline_mode<synchronous>, transform_indices = @transform_8, window_bounds = array<i64: 64, 128>}, {pipeline_mode = #tpu.pipeline_mode<synchronous>, transform_indices = @transform_9, window_bounds = array<i64: 64, 1>}, {pipeline_mode = #tpu.pipeline_mode<synchronous>, transform_indices = @transform_10, window_bounds = array<i64: 20, 64>}, {pipeline_mode = #tpu.pipeline_mode<synchronous>, transform_indices = @transform_11, window_bounds = array<i64: 20, 1>}, {pipeline_mode = #tpu.pipeline_mode<synchronous>, transform_indices = @transform_12, window_bounds = array<i64: 20, 1>}, {pipeline_mode = #tpu.pipeline_mode<synchronous>, transform_indices = @transform_13, window_bounds = array<i64: 1, 1>}, {transform_indices = @transform_14, window_bounds = array<i64: 20, 128>}]} {
    %c0 = arith.constant 0 : index
    %c0_0 = arith.constant 0 : index
    %0 = vector.load %arg1[%c0, %c0_0] : memref<20x128xf32, #tpu.memory_space<vmem>>, vector<20x128xf32>
    %cst = arith.constant dense<0.000000e+00> : vector<128xf32>
    %1 = vector.multi_reduction <add>, %0, %cst [0] : vector<20x128xf32> to vector<128xf32>
    %2 = vector.shape_cast %1 : vector<128xf32> to vector<1x128xf32>
    %cst_1 = arith.constant 2.000000e+01 : f32
    %3 = vector.broadcast %cst_1 : f32 to vector<1x128xf32>
    %4 = arith.divf %2, %3 : vector<1x128xf32>
    %5 = vector.broadcast %4 : vector<1x128xf32> to vector<20x128xf32>
    %6 = arith.subf %0, %5 : vector<20x128xf32>
    %7 = arith.mulf %6, %6 : vector<20x128xf32>
    %cst_2 = arith.constant dense<0.000000e+00> : vector<128xf32>
    %8 = vector.multi_reduction <add>, %7, %cst_2 [0] : vector<20x128xf32> to vector<128xf32>
    %9 = vector.shape_cast %8 : vector<128xf32> to vector<1x128xf32>
    %cst_3 = arith.constant 2.000000e+01 : f32
    %10 = vector.broadcast %cst_3 : f32 to vector<1x128xf32>
    %11 = arith.divf %9, %10 : vector<1x128xf32>
    %cst_4 = arith.constant 9.99999974E-6 : f32
    %12 = vector.broadcast %cst_4 : f32 to vector<1x128xf32>
    %13 = arith.addf %11, %12 : vector<1x128xf32>
    %14 = math.rsqrt %13 : vector<1x128xf32>
    %15 = vector.broadcast %14 : vector<1x128xf32> to vector<20x128xf32>
    %16 = arith.mulf %6, %15 : vector<20x128xf32>
    %c0_5 = arith.constant 0 : index
    %c0_6 = arith.constant 0 : index
    %17 = vector.load %arg2[%c0_5, %c0_6] : memref<20x128xf32, #tpu.memory_space<vmem>>, vector<20x128xf32>
    %cst_7 = arith.constant dense<0.000000e+00> : vector<128xf32>
    %18 = vector.multi_reduction <add>, %17, %cst_7 [0] : vector<20x128xf32> to vector<128xf32>
    %19 = vector.shape_cast %18 : vector<128xf32> to vector<1x128xf32>
    %cst_8 = arith.constant 2.000000e+01 : f32
    %20 = vector.broadcast %cst_8 : f32 to vector<1x128xf32>
    %21 = arith.divf %19, %20 : vector<1x128xf32>
    %22 = vector.broadcast %21 : vector<1x128xf32> to vector<20x128xf32>
    %23 = arith.subf %17, %22 : vector<20x128xf32>
    %24 = arith.mulf %23, %23 : vector<20x128xf32>
    %cst_9 = arith.constant dense<0.000000e+00> : vector<128xf32>
    %25 = vector.multi_reduction <add>, %24, %cst_9 [0] : vector<20x128xf32> to vector<128xf32>
    %26 = vector.shape_cast %25 : vector<128xf32> to vector<1x128xf32>
    %cst_10 = arith.constant 2.000000e+01 : f32
    %27 = vector.broadcast %cst_10 : f32 to vector<1x128xf32>
    %28 = arith.divf %26, %27 : vector<1x128xf32>
    %cst_11 = arith.constant 9.99999974E-6 : f32
    %29 = vector.broadcast %cst_11 : f32 to vector<1x128xf32>
    %30 = arith.addf %28, %29 : vector<1x128xf32>
    %31 = math.rsqrt %30 : vector<1x128xf32>
    %32 = vector.broadcast %31 : vector<1x128xf32> to vector<20x128xf32>
    %33 = arith.mulf %23, %32 : vector<20x128xf32>
    %34 = arith.addf %16, %33 : vector<20x128xf32>
    %c0_12 = arith.constant 0 : index
    %c0_13 = arith.constant 0 : index
    %35 = vector.load %arg3[%c0_12, %c0_13] : memref<20x20xf32, #tpu.memory_space<vmem>>, vector<20x20xf32>
    %cst_14 = arith.constant dense<0.000000e+00> : vector<20x128xf32>
    %36 = tpu.matmul %35, %34, %cst_14 {dimension_numbers = #tpu.dot_dimension_numbers<[1], [0], [0], [1], [0, 0, 1, 1], [], []>} : vector<20x20xf32>, vector<20x128xf32>, vector<20x128xf32> -> vector<20x128xf32>
    %c0_15 = arith.constant 0 : index
    %c0_16 = arith.constant 0 : index
    %37 = vector.load %arg4[%c0_15, %c0_16] : memref<20x1xf32, #tpu.memory_space<vmem>>, vector<20x1xf32>
    %38 = vector.broadcast %37 : vector<20x1xf32> to vector<20x128xf32>
    %39 = arith.addf %36, %38 : vector<20x128xf32>
    %c0_17 = arith.constant 0 : index
    %c0_18 = arith.constant 0 : index
    %40 = vector.load %arg13[%c0_17, %c0_18] : memref<20x1xf32, #tpu.memory_space<vmem>>, vector<20x1xf32>
    %41 = vector.broadcast %40 : vector<20x1xf32> to vector<20x128xf32>
    %42 = arith.mulf %34, %41 : vector<20x128xf32>
    %cst_19 = arith.constant dense<0.000000e+00> : vector<128xf32>
    %43 = vector.multi_reduction <add>, %42, %cst_19 [0] : vector<20x128xf32> to vector<128xf32>
    %44 = vector.shape_cast %43 : vector<128xf32> to vector<1x128xf32>
    %c0_20 = arith.constant 0 : index
    %c0_21 = arith.constant 0 : index
    %45 = vector.load %arg14[%c0_20, %c0_21] : memref<1x1xf32, #tpu.memory_space<vmem>>, vector<1x1xf32>
    %46 = vector.broadcast %45 : vector<1x1xf32> to vector<1x128xf32>
    %47 = arith.addf %44, %46 : vector<1x128xf32>
    %48 = arith.negf %47 : vector<1x128xf32>
    %49 = math.exp %48 : vector<1x128xf32>
    %cst_22 = arith.constant 1.000000e+00 : f32
    %50 = vector.broadcast %cst_22 : f32 to vector<1x128xf32>
    %51 = arith.addf %50, %49 : vector<1x128xf32>
    %52 = arith.divf %50, %51 : vector<1x128xf32>
    %c0_23 = arith.constant 0 : index
    %c0_24 = arith.constant 0 : index
    %53 = vector.load %arg5[%c0_23, %c0_24] : memref<64x20xf32, #tpu.memory_space<vmem>>, vector<64x20xf32>
    %cst_25 = arith.constant dense<0.000000e+00> : vector<64x128xf32>
    %54 = tpu.matmul %53, %34, %cst_25 {dimension_numbers = #tpu.dot_dimension_numbers<[1], [0], [0], [1], [0, 0, 1, 1], [], []>} : vector<64x20xf32>, vector<20x128xf32>, vector<64x128xf32> -> vector<64x128xf32>
    %c0_26 = arith.constant 0 : index
    %c0_27 = arith.constant 0 : index
    %55 = vector.load %arg6[%c0_26, %c0_27] : memref<64x1xf32, #tpu.memory_space<vmem>>, vector<64x1xf32>
    %56 = vector.broadcast %55 : vector<64x1xf32> to vector<64x128xf32>
    %57 = arith.addf %54, %56 : vector<64x128xf32>
    %cst_28 = arith.constant 0.000000e+00 : f32
    %58 = vector.broadcast %cst_28 : f32 to vector<64x128xf32>
    %59 = arith.maximumf %57, %58 : vector<64x128xf32>
    %c0_29 = arith.constant 0 : index
    %c0_30 = arith.constant 0 : index
    %60 = vector.load %arg7[%c0_29, %c0_30] : memref<128x64xf32, #tpu.memory_space<vmem>>, vector<128x64xf32>
    %cst_31 = arith.constant dense<0.000000e+00> : vector<128x128xf32>
    %61 = tpu.matmul %60, %59, %cst_31 {dimension_numbers = #tpu.dot_dimension_numbers<[1], [0], [0], [1], [0, 0, 1, 1], [], []>} : vector<128x64xf32>, vector<64x128xf32>, vector<128x128xf32> -> vector<128x128xf32>
    %c0_32 = arith.constant 0 : index
    %c0_33 = arith.constant 0 : index
    %62 = vector.load %arg8[%c0_32, %c0_33] : memref<128x1xf32, #tpu.memory_space<vmem>>, vector<128x1xf32>
    %63 = vector.broadcast %62 : vector<128x1xf32> to vector<128x128xf32>
    %64 = arith.addf %61, %63 : vector<128x128xf32>
    %cst_34 = arith.constant 0.000000e+00 : f32
    %65 = vector.broadcast %cst_34 : f32 to vector<128x128xf32>
    %66 = arith.maximumf %64, %65 : vector<128x128xf32>
    %c0_35 = arith.constant 0 : index
    %c0_36 = arith.constant 0 : index
    %67 = vector.load %arg9[%c0_35, %c0_36] : memref<64x128xf32, #tpu.memory_space<vmem>>, vector<64x128xf32>
    %cst_37 = arith.constant dense<0.000000e+00> : vector<64x128xf32>
    %68 = tpu.matmul %67, %66, %cst_37 {dimension_numbers = #tpu.dot_dimension_numbers<[1], [0], [0], [1], [0, 0, 1, 1], [], []>} : vector<64x128xf32>, vector<128x128xf32>, vector<64x128xf32> -> vector<64x128xf32>
    %c0_38 = arith.constant 0 : index
    %c0_39 = arith.constant 0 : index
    %69 = vector.load %arg10[%c0_38, %c0_39] : memref<64x1xf32, #tpu.memory_space<vmem>>, vector<64x1xf32>
    %70 = vector.broadcast %69 : vector<64x1xf32> to vector<64x128xf32>
    %71 = arith.addf %68, %70 : vector<64x128xf32>
    %cst_40 = arith.constant 0.000000e+00 : f32
    %72 = vector.broadcast %cst_40 : f32 to vector<64x128xf32>
    %73 = arith.maximumf %71, %72 : vector<64x128xf32>
    %c0_41 = arith.constant 0 : index
    %c0_42 = arith.constant 0 : index
    %74 = vector.load %arg11[%c0_41, %c0_42] : memref<20x64xf32, #tpu.memory_space<vmem>>, vector<20x64xf32>
    %cst_43 = arith.constant dense<0.000000e+00> : vector<20x128xf32>
    %75 = tpu.matmul %74, %73, %cst_43 {dimension_numbers = #tpu.dot_dimension_numbers<[1], [0], [0], [1], [0, 0, 1, 1], [], []>} : vector<20x64xf32>, vector<64x128xf32>, vector<20x128xf32> -> vector<20x128xf32>
    %c0_44 = arith.constant 0 : index
    %c0_45 = arith.constant 0 : index
    %76 = vector.load %arg12[%c0_44, %c0_45] : memref<20x1xf32, #tpu.memory_space<vmem>>, vector<20x1xf32>
    %77 = vector.broadcast %76 : vector<20x1xf32> to vector<20x128xf32>
    %78 = arith.addf %75, %77 : vector<20x128xf32>
    %79 = vector.broadcast %52 : vector<1x128xf32> to vector<20x128xf32>
    %80 = arith.mulf %79, %78 : vector<20x128xf32>
    %cst_46 = arith.constant 1.000000e+00 : f32
    %81 = vector.broadcast %cst_46 : f32 to vector<1x128xf32>
    %82 = arith.subf %81, %52 : vector<1x128xf32>
    %83 = vector.broadcast %82 : vector<1x128xf32> to vector<20x128xf32>
    %84 = arith.mulf %83, %39 : vector<20x128xf32>
    %85 = arith.addf %80, %84 : vector<20x128xf32>
    %c0_47 = arith.constant 0 : index
    %c0_48 = arith.constant 0 : index
    %86 = vector.load %arg15[%c0_47, %c0_48] : memref<20x128xf32, #tpu.memory_space<vmem>>, vector<20x128xf32>
    tpu.vector_store %arg15[%c0_47, %c0_48], %85 {strides = array<i32>} : memref<20x128xf32, #tpu.memory_space<vmem>>, vector<20x128xf32>,
    return
  }
  func.func @transform_0(%arg0: i32) -> (i32, i32) {
    %c0_i32 = arith.constant 0 : i32
    %c0_i32_0 = arith.constant 0 : i32
    return %c0_i32, %arg0 : i32, i32
  }
  func.func @transform_1(%arg0: i32) -> (i32, i32) {
    %c0_i32 = arith.constant 0 : i32
    %c0_i32_0 = arith.constant 0 : i32
    return %c0_i32, %arg0 : i32, i32
  }
  func.func @transform_2(%arg0: i32) -> (i32, i32) {
    %c0_i32 = arith.constant 0 : i32
    %c0_i32_0 = arith.constant 0 : i32
    %c0_i32_1 = arith.constant 0 : i32
    return %c0_i32, %c0_i32_0 : i32, i32
  }
  func.func @transform_3(%arg0: i32) -> (i32, i32) {
    %c0_i32 = arith.constant 0 : i32
    %c0_i32_0 = arith.constant 0 : i32
    %c0_i32_1 = arith.constant 0 : i32
    return %c0_i32, %c0_i32_0 : i32, i32
  }
  func.func @transform_4(%arg0: i32) -> (i32, i32) {
    %c0_i32 = arith.constant 0 : i32
    %c0_i32_0 = arith.constant 0 : i32
    %c0_i32_1 = arith.constant 0 : i32
    return %c0_i32, %c0_i32_0 : i32, i32
  }
  func.func @transform_5(%arg0: i32) -> (i32, i32) {
    %c0_i32 = arith.constant 0 : i32
    %c0_i32_0 = arith.constant 0 : i32
    %c0_i32_1 = arith.constant 0 : i32
    return %c0_i32, %c0_i32_0 : i32, i32
  }
  func.func @transform_6(%arg0: i32) -> (i32, i32) {
    %c0_i32 = arith.constant 0 : i32
    %c0_i32_0 = arith.constant 0 : i32
    %c0_i32_1 = arith.constant 0 : i32
    return %c0_i32, %c0_i32_0 : i32, i32
  }
  func.func @transform_7(%arg0: i32) -> (i32, i32) {
    %c0_i32 = arith.constant 0 : i32
    %c0_i32_0 = arith.constant 0 : i32
    %c0_i32_1 = arith.constant 0 : i32
    return %c0_i32, %c0_i32_0 : i32, i32
  }
  func.func @transform_8(%arg0: i32) -> (i32, i32) {
    %c0_i32 = arith.constant 0 : i32
    %c0_i32_0 = arith.constant 0 : i32
    %c0_i32_1 = arith.constant 0 : i32
    return %c0_i32, %c0_i32_0 : i32, i32
  }
  func.func @transform_9(%arg0: i32) -> (i32, i32) {
    %c0_i32 = arith.constant 0 : i32
    %c0_i32_0 = arith.constant 0 : i32
    %c0_i32_1 = arith.constant 0 : i32
    return %c0_i32, %c0_i32_0 : i32, i32
  }
  func.func @transform_10(%arg0: i32) -> (i32, i32) {
    %c0_i32 = arith.constant 0 : i32
    %c0_i32_0 = arith.constant 0 : i32
    %c0_i32_1 = arith.constant 0 : i32
    return %c0_i32, %c0_i32_0 : i32, i32
  }
  func.func @transform_11(%arg0: i32) -> (i32, i32) {
    %c0_i32 = arith.constant 0 : i32
    %c0_i32_0 = arith.constant 0 : i32
    %c0_i32_1 = arith.constant 0 : i32
    return %c0_i32, %c0_i32_0 : i32, i32
  }
  func.func @transform_12(%arg0: i32) -> (i32, i32) {
    %c0_i32 = arith.constant 0 : i32
    %c0_i32_0 = arith.constant 0 : i32
    %c0_i32_1 = arith.constant 0 : i32
    return %c0_i32, %c0_i32_0 : i32, i32
  }
  func.func @transform_13(%arg0: i32) -> (i32, i32) {
    %c0_i32 = arith.constant 0 : i32
    %c0_i32_0 = arith.constant 0 : i32
    %c0_i32_1 = arith.constant 0 : i32
    return %c0_i32, %c0_i32_0 : i32, i32
  }
  func.func @transform_14(%arg0: i32) -> (i32, i32) {
    %c0_i32 = arith.constant 0 : i32
    %c0_i32_0 = arith.constant 0 : i32
    return %c0_i32, %arg0 : i32, i32
  }
}

</mosaic_0001>

<llo_original>
// kernel: drug_combination_predictor.1
$region0: #{drug_combination_predictor.1}
  #allocation0 [shape = 'u32[]', space=smem, size = 0x4, offset = 0x4, fixed_abs, tag = 'smem constant byte address 0x4 - core index']
  #allocation1 [shape = 'u32[144,128]{1,0:T(1,128)}', space=vmem, size = 0x12000, scoped, tag = 'internal scratch']
  #allocation2 [shape = 'f32[1,1]{1,0:T(1,128)S(1)}', space=vmem, size = 0x200, scoped, tag = 'scoped memory for drug_combination_predictor.1']
  %s0 = inlined_call_operand.vmem [shape: f32[20,128], index: 0, kind: input, shape index: {}]
  %s1 = inlined_call_operand.vmem [shape: f32[20,128], index: 1, kind: input, shape index: {}]
  %s2 = inlined_call_operand.vmem [shape: f32[20,20], index: 2, kind: input, shape index: {}]
  %s3 = inlined_call_operand.vmem [shape: f32[20,1], index: 3, kind: input, shape index: {}]
  %s4 = inlined_call_operand.vmem [shape: f32[64,20], index: 4, kind: input, shape index: {}]
  %s5 = inlined_call_operand.vmem [shape: f32[64,1], index: 5, kind: input, shape index: {}]
  %s6 = inlined_call_operand.vmem [shape: f32[128,64], index: 6, kind: input, shape index: {}]
  %s7 = inlined_call_operand.vmem [shape: f32[128,1], index: 7, kind: input, shape index: {}]
  %s8 = inlined_call_operand.vmem [shape: f32[64,128], index: 8, kind: input, shape index: {}]
  %s9 = inlined_call_operand.vmem [shape: f32[64,1], index: 9, kind: input, shape index: {}]
  %s10 = inlined_call_operand.vmem [shape: f32[20,64], index: 10, kind: input, shape index: {}]
  %s11 = inlined_call_operand.vmem [shape: f32[20,1], index: 11, kind: input, shape index: {}]
  %s12 = inlined_call_operand.vmem [shape: f32[20,1], index: 12, kind: input, shape index: {}]
  %s13 = inlined_call_operand.<no memory space> [shape: f32[1,1], index: 13, kind: input, shape index: {}]
  %s14 = inlined_call_operand.vmem [shape: f32[20,128], index: 14, kind: output, shape index: {}]
  %s15 = sld [smem:[#allocation0]]
  $region66: #{drug_combination_predictor.1} parent=0
    _
  %s17 = ssub.s32 1, %s15
  %s18 = scalar_select 0, %s17, %s15
  %v19 = vstv %s13
  %20 = vst [vmem:[#allocation2] sm:$0x1] %v19
  // Predicated region
  $region2: #{drug_combination_predictor.1} parent=0 // pred_check
    _
  $region3: #{drug_combination_predictor.1} parent=0 // pred_check_branch
    %22 = sbr.rel (0) target = $region5
  $region4: #{drug_combination_predictor.1} parent=0 // pred_region
    _
  $region5: #{drug_combination_predictor.1} parent=0 // pred_fallthru
    _
  // Predicated region
  $region6: #{drug_combination_predictor.1} parent=0 // pred_check
    _
  $region7: #{drug_combination_predictor.1} parent=0 // pred_check_branch
    %24 = sbr.rel (0) target = $region9
  $region8: #{drug_combination_predictor.1} parent=0 // pred_region
    _
  $region9: #{drug_combination_predictor.1} parent=0 // pred_fallthru
    _
  // Predicated region
  $region10: #{drug_combination_predictor.1} parent=0 // pred_check
    _
  $region11: #{drug_combination_predictor.1} parent=0 // pred_check_branch
    %26 = sbr.rel (0) target = $region13
  $region12: #{drug_combination_predictor.1} parent=0 // pred_region
    _
  $region13: #{drug_combination_predictor.1} parent=0 // pred_fallthru
    _
  // Predicated region
  $region14: #{drug_combination_predictor.1} parent=0 // pred_check
    _
  $region15: #{drug_combination_predictor.1} parent=0 // pred_check_branch
    %28 = sbr.rel (0) target = $region17
  $region16: #{drug_combination_predictor.1} parent=0 // pred_region
    _
  $region17: #{drug_combination_predictor.1} parent=0 // pred_fallthru
    _
  // Predicated region
  $region18: #{drug_combination_predictor.1} parent=0 // pred_check
    _
  $region19: #{drug_combination_predictor.1} parent=0 // pred_check_branch
    %30 = sbr.rel (0) target = $region21
  $region20: #{drug_combination_predictor.1} parent=0 // pred_region
    _
  $region21: #{drug_combination_predictor.1} parent=0 // pred_fallthru
    _
  // Predicated region
  $region22: #{drug_combination_predictor.1} parent=0 // pred_check
    _
  $region23: #{drug_combination_predictor.1} parent=0 // pred_check_branch
    %32 = sbr.rel (0) target = $region25
  $region24: #{drug_combination_predictor.1} parent=0 // pred_region
    _
  $region25: #{drug_combination_predictor.1} parent=0 // pred_fallthru
    _
  // Predicated region
  $region26: #{drug_combination_predictor.1} parent=0 // pred_check
    _
  $region27: #{drug_combination_predictor.1} parent=0 // pred_check_branch
    %34 = sbr.rel (0) target = $region29
  $region28: #{drug_combination_predictor.1} parent=0 // pred_region
    _
  $region29: #{drug_combination_predictor.1} parent=0 // pred_fallthru
    _
  // Predicated region
  $region30: #{drug_combination_predictor.1} parent=0 // pred_check
    _
  $region31: #{drug_combination_predictor.1} parent=0 // pred_check_branch
    %36 = sbr.rel (0) target = $region33
  $region32: #{drug_combination_predictor.1} parent=0 // pred_region
    _
  $region33: #{drug_combination_predictor.1} parent=0 // pred_fallthru
    _
  // Predicated region
  $region34: #{drug_combination_predictor.1} parent=0 // pred_check
    _
  $region35: #{drug_combination_predictor.1} parent=0 // pred_check_branch
    %38 = sbr.rel (0) target = $region37
  $region36: #{drug_combination_predictor.1} parent=0 // pred_region
    _
  $region37: #{drug_combination_predictor.1} parent=0 // pred_fallthru
    _
  // Predicated region
  $region38: #{drug_combination_predictor.1} parent=0 // pred_check
    _
  $region39: #{drug_combination_predictor.1} parent=0 // pred_check_branch
    %40 = sbr.rel (0) target = $region41
  $region40: #{drug_combination_predictor.1} parent=0 // pred_region
    _
  $region41: #{drug_combination_predictor.1} parent=0 // pred_fallthru
    _
  // Predicated region
  $region42: #{drug_combination_predictor.1} parent=0 // pred_check
    _
  $region43: #{drug_combination_predictor.1} parent=0 // pred_check_branch
    %42 = sbr.rel (0) target = $region45
  $region44: #{drug_combination_predictor.1} parent=0 // pred_region
    _
  $region45: #{drug_combination_predictor.1} parent=0 // pred_fallthru
    _
  // Predicated region
  $region46: #{drug_combination_predictor.1} parent=0 // pred_check
    _
  $region47: #{drug_combination_predictor.1} parent=0 // pred_check_branch
    %44 = sbr.rel (0) target = $region49
  $region48: #{drug_combination_predictor.1} parent=0 // pred_region
    _
  $region49: #{drug_combination_predictor.1} parent=0 // pred_fallthru
    _
  // Predicated region
  $region50: #{drug_combination_predictor.1} parent=0 // pred_check
    _
  $region51: #{drug_combination_predictor.1} parent=0 // pred_check_branch
    %46 = sbr.rel (0) target = $region53
  $region52: #{drug_combination_predictor.1} parent=0 // pred_region
    _
  $region53: #{drug_combination_predictor.1} parent=0 // pred_fallthru
    _
  // Predicated region
  $region54: #{drug_combination_predictor.1} parent=0 // pred_check
    _
  $region55: #{drug_combination_predictor.1} parent=0 // pred_check_branch
    %48 = sbr.rel (0) target = $region57
  $region56: #{drug_combination_predictor.1} parent=0 // pred_region
    _
  $region57: #{drug_combination_predictor.1} parent=0 // pred_fallthru
    _
  %v49 = vld [vmem:[%s0] sm:$0xff]
  %v50 = vld [vmem:[%s0 + $0x8] sm:$0xff]
  %v51 = vld [vmem:[%s0 + $0x10] sm:$0xf]
  %v52 = vadd.f32 %v49, %v50
  %vm53 = vcmask 1043456
  %v54 = vsel %vm53, %v51, 0.0
  %v55 = vadd.f32 %v52, %v54
  %v56 = vrot.slane %v55, 4
  %v57 = vadd.f32 %v55, %v56
  %v58 = vrot.slane %v57, 2
  %v59 = vadd.f32 %v57, %v58
  %v60 = vrot.slane %v59, 1
  %v61 = vadd.f32 %v59, %v60
  %v62 = vrcp.pop 20.0
  %v63 = vmul.f32 %v61, %v62
  %v64 = vsub.f32 %v49, %v63
  %v65 = vsub.f32 %v50, %v63
  %v66 = vsub.f32 %v51, %v63
  %v67 = vmul.f32 %v64, %v64
  %v68 = vmul.f32 %v65, %v65
  %v69 = vmul.f32 %v66, %v66
  %v70 = vadd.f32 %v67, %v68
  %v71 = vsel %vm53, %v69, 0.0
  %v72 = vadd.f32 %v70, %v71
  %v73 = vrot.slane %v72, 4
  %v74 = vadd.f32 %v72, %v73
  %v75 = vrot.slane %v74, 2
  %v76 = vadd.f32 %v74, %v75
  %v77 = vrot.slane %v76, 1
  %v78 = vadd.f32 %v76, %v77
  %v79 = vmul.f32 %v78, %v62
  %v80 = vadd.f32 %v79, 1e-05
  %v81 = vrsqrt.pop %v80
  %v82 = vmul.f32 %v64, %v81
  %v83 = vmul.f32 %v65, %v81
  %v84 = vmul.f32 %v66, %v81
  %v85 = vld [vmem:[%s1] sm:$0xff]
  %v86 = vld [vmem:[%s1 + $0x8] sm:$0xff]
  %v87 = vld [vmem:[%s1 + $0x10] sm:$0xf]
  %v88 = vadd.f32 %v85, %v86
  %v89 = vsel %vm53, %v87, 0.0
  %v90 = vadd.f32 %v88, %v89
  %v91 = vrot.slane %v90, 4
  %v92 = vadd.f32 %v90, %v91
  %v93 = vrot.slane %v92, 2
  %v94 = vadd.f32 %v92, %v93
  %v95 = vrot.slane %v94, 1
  %v96 = vadd.f32 %v94, %v95
  %v97 = vmul.f32 %v96, %v62
  %v98 = vsub.f32 %v85, %v97
  %v99 = vsub.f32 %v86, %v97
  %v100 = vsub.f32 %v87, %v97
  %v101 = vmul.f32 %v98, %v98
  %v102 = vmul.f32 %v99, %v99
  %v103 = vmul.f32 %v100, %v100
  %v104 = vadd.f32 %v101, %v102
  %v105 = vsel %vm53, %v103, 0.0
  %v106 = vadd.f32 %v104, %v105
  %v107 = vrot.slane %v106, 4
  %v108 = vadd.f32 %v106, %v107
  %v109 = vrot.slane %v108, 2
  %v110 = vadd.f32 %v108, %v109
  %v111 = vrot.slane %v110, 1
  %v112 = vadd.f32 %v110, %v111
  %v113 = vmul.f32 %v112, %v62
  %v114 = vadd.f32 %v113, 1e-05
  %v115 = vrsqrt.pop %v114
  %v116 = vmul.f32 %v98, %v115
  %v117 = vmul.f32 %v99, %v115
  %v118 = vmul.f32 %v100, %v115
  %v119 = vadd.f32 %v82, %v116
  %v120 = vadd.f32 %v83, %v117
  %v121 = vadd.f32 %v84, %v118
  %v122 = vld [vmem:[%s2] sm:$0xff]
  %v123 = vld [vmem:[%s2 + $0x8] sm:$0xff]
  %v124 = vld [vmem:[%s2 + $0x10] sm:$0xf]
  %v125 = vld [vmem:[%s3] sm:$0xff]
  %v126 = vld [vmem:[%s3 + $0x8] sm:$0xff]
  %v127 = vld [vmem:[%s3 + $0x10] sm:$0xf]
  %129 = vset.pattern.permute.xlu0 0
  %130 = vperm.xlu0 %129, %v125
  %v131 = vpop.permute.xlu0 %130
  %134 = vset.pattern.permute.xlu0 0
  %135 = vperm.xlu0 %134, %v126
  %v136 = vpop.permute.xlu0 %135
  %139 = vset.pattern.permute.xlu0 0
  %140 = vperm.xlu0 %139, %v127
  %v141 = vpop.permute.xlu0 %140
  %vm143 = vcmask 162816
  %v145 = vsel %vm143, %v122, 0
  %v148 = vsel %vm143, %v123, 0
  %v151 = vsel %vm143, %v124, 0
  %v154 = vsel %vm53, %v121, 0
  %156 = vmatprep.subr.mxu0 0.0
  %157 = vmatpush1.msra.mxu0 0.0
  %158 = vmatprep.subr.mxu0 0.0
  %159 = vmatpush1.msra.mxu0 0.0
  %160 = vmatprep.subr.mxu0 0.0
  %161 = vmatpush1.msra.mxu0 0.0
  %162 = vmatprep.subr.mxu0 0.0
  %163 = vmatpush1.msra.mxu0 0.0
  %164 = vmatprep.subr.mxu0 0.0
  %165 = vmatpush1.msra.mxu0 0.0
  %166 = vmatprep.subr.mxu0 0.0
  %167 = vmatpush1.msra.mxu0 0.0
  %168 = vmatprep.subr.mxu0 0.0
  %169 = vmatpush1.msra.mxu0 0.0
  %170 = vmatprep.subr.mxu0 0.0
  %171 = vmatpush1.msra.mxu0 0.0
  %172 = vmatprep.subr.mxu0 0.0
  %173 = vmatpush1.msra.mxu0 0.0
  %174 = vmatprep.subr.mxu0 0.0
  %175 = vmatpush1.msra.mxu0 0.0
  %176 = vmatprep.subr.mxu0 0.0
  %177 = vmatpush1.msra.mxu0 0.0
  %178 = vmatprep.subr.mxu0 0.0
  %179 = vmatpush1.msra.mxu0 0.0
  %180 = vmatprep.subr.mxu0 0.0
  %181 = vmatpush1.msra.mxu0 0.0
  %182 = vmatprep.subr.mxu0 0.0
  %183 = vmatpush1.msra.mxu0 %v154
  %184 = vmatprep.subr.mxu0 0.0
  %185 = vmatpush1.msra.mxu0 %v120
  %186 = vmatprep.subr.mxu0 0.0
  %187 = vmatpush1.msra.mxu0 %v119
  %188 = vmatprep.subr.mxu0 0.0
  %189 = vmatpush2.msra.mxu0 0.0
  %190 = vmatprep.subr.mxu0 0.0
  %191 = vmatpush2.msra.mxu0 0.0
  %192 = vmatprep.subr.mxu0 0.0
  %193 = vmatpush2.msra.mxu0 0.0
  %194 = vmatprep.subr.mxu0 0.0
  %195 = vmatpush2.msra.mxu0 0.0
  %196 = vmatprep.subr.mxu0 0.0
  %197 = vmatpush2.msra.mxu0 0.0
  %198 = vmatprep.subr.mxu0 0.0
  %199 = vmatpush2.msra.mxu0 0.0
  %200 = vmatprep.subr.mxu0 0.0
  %201 = vmatpush2.msra.mxu0 0.0
  %202 = vmatprep.subr.mxu0 0.0
  %203 = vmatpush2.msra.mxu0 0.0
  %204 = vmatprep.subr.mxu0 0.0
  %205 = vmatpush2.msra.mxu0 0.0
  %206 = vmatprep.subr.mxu0 0.0
  %207 = vmatpush2.msra.mxu0 0.0
  %208 = vmatprep.subr.mxu0 0.0
  %209 = vmatpush2.msra.mxu0 0.0
  %210 = vmatprep.subr.mxu0 0.0
  %211 = vmatpush2.msra.mxu0 0.0
  %212 = vmatprep.subr.mxu0 0.0
  %213 = vmatpush2.msra.mxu0 0.0
  %214 = vmatprep.subr.mxu0 0.0
  %215 = vmatpush2.msra.mxu0 0.0
  %216 = vmatprep.subr.mxu0 0.0
  %217 = vmatpush2.msra.mxu0 0.0
  %218 = vmatprep.subr.mxu0 0.0
  %219 = vmatpush2.msra.mxu0 0.0
  %220 = vmatprep.mubr.f32.mxu0 0.0
  %221 = vmatmul.mubr.f32.gmra.mxu0 %v145
  %v222 = vpop.f32.mrf.mxu0
  %v223 = vadd.f32 %v131, %v222
  %v224 = vpop.f32.mrf.mxu0
  %225 = vmatprep.mubr.f32.mxu0 0.0
  %226 = vmatmul.mubr.f32.gmra.mxu0 %v148
  %v227 = vpop.f32.mrf.mxu0
  %v228 = vadd.f32 %v136, %v227
  %v229 = vpop.f32.mrf.mxu0
  %230 = vmatprep.mubr.f32.mxu0 0.0
  %231 = vmatmul.mubr.f32.gmra.mxu0 %v151
  %v232 = vpop.f32.mrf.mxu0
  %v233 = vadd.f32 %v141, %v232
  %v234 = vpop.f32.mrf.mxu0
  %235 = vdwg.mxu0
  %v236 = vld [vmem:[%s12] sm:$0xff]
  %v237 = vld [vmem:[%s12 + $0x8] sm:$0xff]
  %v238 = vld [vmem:[%s12 + $0x10] sm:$0xf]
  %240 = vset.pattern.permute.xlu0 0
  %241 = vperm.xlu0 %240, %v236
  %v242 = vpop.permute.xlu0 %241
  %245 = vset.pattern.permute.xlu0 0
  %246 = vperm.xlu0 %245, %v237
  %v247 = vpop.permute.xlu0 %246
  %250 = vset.pattern.permute.xlu0 0
  %251 = vperm.xlu0 %250, %v238
  %v252 = vpop.permute.xlu0 %251
  %v254 = vmul.f32 %v119, %v242
  %v255 = vmul.f32 %v120, %v247
  %v256 = vmul.f32 %v121, %v252
  %v257 = vadd.f32 %v254, %v255
  %v258 = vsel %vm53, %v256, 0.0
  %v259 = vadd.f32 %v257, %v258
  %v260 = vrot.slane %v259, 4
  %v261 = vadd.f32 %v259, %v260
  %v262 = vrot.slane %v261, 2
  %v263 = vadd.f32 %v261, %v262
  %v264 = vrot.slane %v263, 1
  %v265 = vadd.f32 %v263, %v264
  %v266 = vld [vmem:[#allocation2] sm:$0x1]
  %268 = vset.pattern.permute.xlu0 0
  %269 = vperm.xlu0 %268, %v266
  %v270 = vpop.permute.xlu0 %269
  %v272 = vlaneseq
  %v273 = vshrl.u32 %v272, 7
  %v274 = vsub.s32 0, %v273
  %v275 = vrot.slane %v270, %v274
  %v276 = vadd.f32 %v265, %v275
  %v277 = vxor.u32 %v276, 2147483648
  %v278 = vmul.f32 %v277, 1.442695
  %v279 = vpow.pop %v278
  %v280 = vadd.f32 %v279, 1.0
  %v281 = vrcp.pop %v280
  %v282 = vmul.f32 1.0, %v281
  %v283 = vld [vmem:[%s4] sm:$0xff]
  %v284 = vld [vmem:[%s4 + $0x8] sm:$0xff]
  %v285 = vld [vmem:[%s4 + $0x10] sm:$0xff]
  %v286 = vld [vmem:[%s4 + $0x18] sm:$0xff]
  %v287 = vld [vmem:[%s4 + $0x20] sm:$0xff]
  %v288 = vld [vmem:[%s4 + $0x28] sm:$0xff]
  %v289 = vld [vmem:[%s4 + $0x30] sm:$0xff]
  %v290 = vld [vmem:[%s4 + $0x38] sm:$0xff]
  %v291 = vld [vmem:[%s5] sm:$0xff]
  %v292 = vld [vmem:[%s5 + $0x8] sm:$0xff]
  %v293 = vld [vmem:[%s5 + $0x10] sm:$0xff]
  %v294 = vld [vmem:[%s5 + $0x18] sm:$0xff]
  %v295 = vld [vmem:[%s5 + $0x20] sm:$0xff]
  %v296 = vld [vmem:[%s5 + $0x28] sm:$0xff]
  %v297 = vld [vmem:[%s5 + $0x30] sm:$0xff]
  %v298 = vld [vmem:[%s5 + $0x38] sm:$0xff]
  %300 = vset.pattern.permute.xlu0 0
  %301 = vperm.xlu0 %300, %v291
  %v302 = vpop.permute.xlu0 %301
  %305 = vset.pattern.permute.xlu0 0
  %306 = vperm.xlu0 %305, %v292
  %v307 = vpop.permute.xlu0 %306
  %310 = vset.pattern.permute.xlu0 0
  %311 = vperm.xlu0 %310, %v293
  %v312 = vpop.permute.xlu0 %311
  %315 = vset.pattern.permute.xlu0 0
  %316 = vperm.xlu0 %315, %v294
  %v317 = vpop.permute.xlu0 %316
  %320 = vset.pattern.permute.xlu0 0
  %321 = vperm.xlu0 %320, %v295
  %v322 = vpop.permute.xlu0 %321
  %325 = vset.pattern.permute.xlu0 0
  %326 = vperm.xlu0 %325, %v296
  %v327 = vpop.permute.xlu0 %326
  %330 = vset.pattern.permute.xlu0 0
  %331 = vperm.xlu0 %330, %v297
  %v332 = vpop.permute.xlu0 %331
  %335 = vset.pattern.permute.xlu0 0
  %336 = vperm.xlu0 %335, %v298
  %v337 = vpop.permute.xlu0 %336
  %v340 = vsel %vm143, %v283, 0
  %v343 = vsel %vm143, %v284, 0
  %v346 = vsel %vm143, %v285, 0
  %v349 = vsel %vm143, %v286, 0
  %v352 = vsel %vm143, %v287, 0
  %v355 = vsel %vm143, %v288, 0
  %v358 = vsel %vm143, %v289, 0
  %v361 = vsel %vm143, %v290, 0
  %363 = vmatprep.subr.mxu0 0.0
  %364 = vmatpush1.msra.mxu0 0.0
  %365 = vmatprep.subr.mxu0 0.0
  %366 = vmatpush1.msra.mxu0 0.0
  %367 = vmatprep.subr.mxu0 0.0
  %368 = vmatpush1.msra.mxu0 0.0
  %369 = vmatprep.subr.mxu0 0.0
  %370 = vmatpush1.msra.mxu0 0.0
  %371 = vmatprep.subr.mxu0 0.0
  %372 = vmatpush1.msra.mxu0 0.0
  %373 = vmatprep.subr.mxu0 0.0
  %374 = vmatpush1.msra.mxu0 0.0
  %375 = vmatprep.subr.mxu0 0.0
  %376 = vmatpush1.msra.mxu0 0.0
  %377 = vmatprep.subr.mxu0 0.0
  %378 = vmatpush1.msra.mxu0 0.0
  %379 = vmatprep.subr.mxu0 0.0
  %380 = vmatpush1.msra.mxu0 0.0
  %381 = vmatprep.subr.mxu0 0.0
  %382 = vmatpush1.msra.mxu0 0.0
  %383 = vmatprep.subr.mxu0 0.0
  %384 = vmatpush1.msra.mxu0 0.0
  %385 = vmatprep.subr.mxu0 0.0
  %386 = vmatpush1.msra.mxu0 0.0
  %387 = vmatprep.subr.mxu0 0.0
  %388 = vmatpush1.msra.mxu0 0.0
  %389 = vmatprep.subr.mxu0 0.0
  %390 = vmatpush1.msra.mxu0 %v154
  %391 = vmatprep.subr.mxu0 0.0
  %392 = vmatpush1.msra.mxu0 %v120
  %393 = vmatprep.subr.mxu0 0.0
  %394 = vmatpush1.msra.mxu0 %v119
  %395 = vmatprep.subr.mxu0 0.0
  %396 = vmatpush2.msra.mxu0 0.0
  %397 = vmatprep.subr.mxu0 0.0
  %398 = vmatpush2.msra.mxu0 0.0
  %399 = vmatprep.subr.mxu0 0.0
  %400 = vmatpush2.msra.mxu0 0.0
  %401 = vmatprep.subr.mxu0 0.0
  %402 = vmatpush2.msra.mxu0 0.0
  %403 = vmatprep.subr.mxu0 0.0
  %404 = vmatpush2.msra.mxu0 0.0
  %405 = vmatprep.subr.mxu0 0.0
  %406 = vmatpush2.msra.mxu0 0.0
  %407 = vmatprep.subr.mxu0 0.0
  %408 = vmatpush2.msra.mxu0 0.0
  %409 = vmatprep.subr.mxu0 0.0
  %410 = vmatpush2.msra.mxu0 0.0
  %411 = vmatprep.subr.mxu0 0.0
  %412 = vmatpush2.msra.mxu0 0.0
  %413 = vmatprep.subr.mxu0 0.0
  %414 = vmatpush2.msra.mxu0 0.0
  %415 = vmatprep.subr.mxu0 0.0
  %416 = vmatpush2.msra.mxu0 0.0
  %417 = vmatprep.subr.mxu0 0.0
  %418 = vmatpush2.msra.mxu0 0.0
  %419 = vmatprep.subr.mxu0 0.0
  %420 = vmatpush2.msra.mxu0 0.0
  %421 = vmatprep.subr.mxu0 0.0
  %422 = vmatpush2.msra.mxu0 0.0
  %423 = vmatprep.subr.mxu0 0.0
  %424 = vmatpush2.msra.mxu0 0.0
  %425 = vmatprep.subr.mxu0 0.0
  %426 = vmatpush2.msra.mxu0 0.0
  %427 = vmatprep.mubr.f32.mxu0 0.0
  %428 = vmatmul.mubr.f32.gmra.mxu0 %v340
  %v429 = vpop.f32.mrf.mxu0
  %v430 = vadd.f32 %v302, %v429
  %v431 = vpop.f32.mrf.mxu0
  %432 = vmatprep.mubr.f32.mxu0 0.0
  %433 = vmatmul.mubr.f32.gmra.mxu0 %v343
  %v434 = vpop.f32.mrf.mxu0
  %v435 = vadd.f32 %v307, %v434
  %v436 = vpop.f32.mrf.mxu0
  %437 = vmatprep.mubr.f32.mxu0 0.0
  %438 = vmatmul.mubr.f32.gmra.mxu0 %v346
  %v439 = vpop.f32.mrf.mxu0
  %v440 = vadd.f32 %v312, %v439
  %v441 = vpop.f32.mrf.mxu0
  %442 = vmatprep.mubr.f32.mxu0 0.0
  %443 = vmatmul.mubr.f32.gmra.mxu0 %v349
  %v444 = vpop.f32.mrf.mxu0
  %v445 = vadd.f32 %v317, %v444
  %v446 = vpop.f32.mrf.mxu0
  %447 = vmatprep.mubr.f32.mxu0 0.0
  %448 = vmatmul.mubr.f32.gmra.mxu0 %v352
  %v449 = vpop.f32.mrf.mxu0
  %v450 = vadd.f32 %v322, %v449
  %v451 = vpop.f32.mrf.mxu0
  %452 = vmatprep.mubr.f32.mxu0 0.0
  %453 = vmatmul.mubr.f32.gmra.mxu0 %v355
  %v454 = vpop.f32.mrf.mxu0
  %v455 = vadd.f32 %v327, %v454
  %v456 = vpop.f32.mrf.mxu0
  %457 = vmatprep.mubr.f32.mxu0 0.0
  %458 = vmatmul.mubr.f32.gmra.mxu0 %v358
  %v459 = vpop.f32.mrf.mxu0
  %v460 = vadd.f32 %v332, %v459
  %v461 = vpop.f32.mrf.mxu0
  %462 = vmatprep.mubr.f32.mxu0 0.0
  %463 = vmatmul.mubr.f32.gmra.mxu0 %v361
  %v464 = vpop.f32.mrf.mxu0
  %v465 = vadd.f32 %v337, %v464
  %v466 = vpop.f32.mrf.mxu0
  %467 = vdwg.mxu0
  %v468 = vmax.f32 %v430, 0.0
  %v469 = vmax.f32 %v435, 0.0
  %v470 = vmax.f32 %v440, 0.0
  %v471 = vmax.f32 %v445, 0.0
  %v472 = vmax.f32 %v450, 0.0
  %v473 = vmax.f32 %v455, 0.0
  %v474 = vmax.f32 %v460, 0.0
  %v475 = vmax.f32 %v465, 0.0
  %v476 = vld [vmem:[%s6] sm:$0xff]
  %v477 = vld [vmem:[%s6 + $0x8] sm:$0xff]
  %v478 = vld [vmem:[%s6 + $0x10] sm:$0xff]
  %v479 = vld [vmem:[%s6 + $0x18] sm:$0xff]
  %v480 = vld [vmem:[%s6 + $0x20] sm:$0xff]
  %v481 = vld [vmem:[%s6 + $0x28] sm:$0xff]
  %v482 = vld [vmem:[%s6 + $0x30] sm:$0xff]
  %v483 = vld [vmem:[%s6 + $0x38] sm:$0xff]
  %v484 = vld [vmem:[%s6 + $0x40] sm:$0xff]
  %v485 = vld [vmem:[%s6 + $0x48] sm:$0xff]
  %v486 = vld [vmem:[%s6 + $0x50] sm:$0xff]
  %v487 = vld [vmem:[%s6 + $0x58] sm:$0xff]
  %v488 = vld [vmem:[%s6 + $0x60] sm:$0xff]
  %v489 = vld [vmem:[%s6 + $0x68] sm:$0xff]
  %v490 = vld [vmem:[%s6 + $0x70] sm:$0xff]
  %v491 = vld [vmem:[%s6 + $0x78] sm:$0xff]
  %v492 = vld [vmem:[%s7] sm:$0xff]
  %v493 = vld [vmem:[%s7 + $0x8] sm:$0xff]
  %v494 = vld [vmem:[%s7 + $0x10] sm:$0xff]
  %v495 = vld [vmem:[%s7 + $0x18] sm:$0xff]
  %v496 = vld [vmem:[%s7 + $0x20] sm:$0xff]
  %v497 = vld [vmem:[%s7 + $0x28] sm:$0xff]
  %v498 = vld [vmem:[%s7 + $0x30] sm:$0xff]
  %v499 = vld [vmem:[%s7 + $0x38] sm:$0xff]
  %v500 = vld [vmem:[%s7 + $0x40] sm:$0xff]
  %v501 = vld [vmem:[%s7 + $0x48] sm:$0xff]
  %v502 = vld [vmem:[%s7 + $0x50] sm:$0xff]
  %v503 = vld [vmem:[%s7 + $0x58] sm:$0xff]
  %v504 = vld [vmem:[%s7 + $0x60] sm:$0xff]
  %v505 = vld [vmem:[%s7 + $0x68] sm:$0xff]
  %v506 = vld [vmem:[%s7 + $0x70] sm:$0xff]
  %v507 = vld [vmem:[%s7 + $0x78] sm:$0xff]
  %509 = vset.pattern.permute.xlu0 0
  %510 = vperm.xlu0 %509, %v492
  %v511 = vpop.permute.xlu0 %510
  %514 = vset.pattern.permute.xlu0 0
  %515 = vperm.xlu0 %514, %v493
  %v516 = vpop.permute.xlu0 %515
  %519 = vset.pattern.permute.xlu0 0
  %520 = vperm.xlu0 %519, %v494
  %v521 = vpop.permute.xlu0 %520
  %524 = vset.pattern.permute.xlu0 0
  %525 = vperm.xlu0 %524, %v495
  %v526 = vpop.permute.xlu0 %525
  %529 = vset.pattern.permute.xlu0 0
  %530 = vperm.xlu0 %529, %v496
  %v531 = vpop.permute.xlu0 %530
  %534 = vset.pattern.permute.xlu0 0
  %535 = vperm.xlu0 %534, %v497
  %v536 = vpop.permute.xlu0 %535
  %539 = vset.pattern.permute.xlu0 0
  %540 = vperm.xlu0 %539, %v498
  %v541 = vpop.permute.xlu0 %540
  %544 = vset.pattern.permute.xlu0 0
  %545 = vperm.xlu0 %544, %v499
  %v546 = vpop.permute.xlu0 %545
  %549 = vset.pattern.permute.xlu0 0
  %550 = vperm.xlu0 %549, %v500
  %v551 = vpop.permute.xlu0 %550
  %554 = vset.pattern.permute.xlu0 0
  %555 = vperm.xlu0 %554, %v501
  %v556 = vpop.permute.xlu0 %555
  %559 = vset.pattern.permute.xlu0 0
  %560 = vperm.xlu0 %559, %v502
  %v561 = vpop.permute.xlu0 %560
  %564 = vset.pattern.permute.xlu0 0
  %565 = vperm.xlu0 %564, %v503
  %v566 = vpop.permute.xlu0 %565
  %569 = vset.pattern.permute.xlu0 0
  %570 = vperm.xlu0 %569, %v504
  %v571 = vpop.permute.xlu0 %570
  %574 = vset.pattern.permute.xlu0 0
  %575 = vperm.xlu0 %574, %v505
  %v576 = vpop.permute.xlu0 %575
  %579 = vset.pattern.permute.xlu0 0
  %580 = vperm.xlu0 %579, %v506
  %v581 = vpop.permute.xlu0 %580
  %584 = vset.pattern.permute.xlu0 0
  %585 = vperm.xlu0 %584, %v507
  %v586 = vpop.permute.xlu0 %585
  %vm588 = vcmask 523264
  %v590 = vsel %vm588, %v476, 0
  %v593 = vsel %vm588, %v477, 0
  %v596 = vsel %vm588, %v478, 0
  %v599 = vsel %vm588, %v479, 0
  %v602 = vsel %vm588, %v480, 0
  %v605 = vsel %vm588, %v481, 0
  %v608 = vsel %vm588, %v482, 0
  %v611 = vsel %vm588, %v483, 0
  %v614 = vsel %vm588, %v484, 0
  %v617 = vsel %vm588, %v485, 0
  %v620 = vsel %vm588, %v486, 0
  %v623 = vsel %vm588, %v487, 0
  %v626 = vsel %vm588, %v488, 0
  %v629 = vsel %vm588, %v489, 0
  %v632 = vsel %vm588, %v490, 0
  %v635 = vsel %vm588, %v491, 0
  %637 = vmatprep.subr.mxu0 0.0
  %638 = vmatpush1.msra.mxu0 0.0
  %639 = vmatprep.subr.mxu0 0.0
  %640 = vmatpush1.msra.mxu0 0.0
  %641 = vmatprep.subr.mxu0 0.0
  %642 = vmatpush1.msra.mxu0 0.0
  %643 = vmatprep.subr.mxu0 0.0
  %644 = vmatpush1.msra.mxu0 0.0
  %645 = vmatprep.subr.mxu0 0.0
  %646 = vmatpush1.msra.mxu0 0.0
  %647 = vmatprep.subr.mxu0 0.0
  %648 = vmatpush1.msra.mxu0 0.0
  %649 = vmatprep.subr.mxu0 0.0
  %650 = vmatpush1.msra.mxu0 0.0
  %651 = vmatprep.subr.mxu0 0.0
  %652 = vmatpush1.msra.mxu0 0.0
  %653 = vmatprep.subr.mxu0 0.0
  %654 = vmatpush1.msra.mxu0 %v475
  %655 = vmatprep.subr.mxu0 0.0
  %656 = vmatpush1.msra.mxu0 %v474
  %657 = vmatprep.subr.mxu0 0.0
  %658 = vmatpush1.msra.mxu0 %v473
  %659 = vmatprep.subr.mxu0 0.0
  %660 = vmatpush1.msra.mxu0 %v472
  %661 = vmatprep.subr.mxu0 0.0
  %662 = vmatpush1.msra.mxu0 %v471
  %663 = vmatprep.subr.mxu0 0.0
  %664 = vmatpush1.msra.mxu0 %v470
  %665 = vmatprep.subr.mxu0 0.0
  %666 = vmatpush1.msra.mxu0 %v469
  %667 = vmatprep.subr.mxu0 0.0
  %668 = vmatpush1.msra.mxu0 %v468
  %669 = vmatprep.subr.mxu0 0.0
  %670 = vmatpush2.msra.mxu0 0.0
  %671 = vmatprep.subr.mxu0 0.0
  %672 = vmatpush2.msra.mxu0 0.0
  %673 = vmatprep.subr.mxu0 0.0
  %674 = vmatpush2.msra.mxu0 0.0
  %675 = vmatprep.subr.mxu0 0.0
  %676 = vmatpush2.msra.mxu0 0.0
  %677 = vmatprep.subr.mxu0 0.0
  %678 = vmatpush2.msra.mxu0 0.0
  %679 = vmatprep.subr.mxu0 0.0
  %680 = vmatpush2.msra.mxu0 0.0
  %681 = vmatprep.subr.mxu0 0.0
  %682 = vmatpush2.msra.mxu0 0.0
  %683 = vmatprep.subr.mxu0 0.0
  %684 = vmatpush2.msra.mxu0 0.0
  %685 = vmatprep.subr.mxu0 0.0
  %686 = vmatpush2.msra.mxu0 0.0
  %687 = vmatprep.subr.mxu0 0.0
  %688 = vmatpush2.msra.mxu0 0.0
  %689 = vmatprep.subr.mxu0 0.0
  %690 = vmatpush2.msra.mxu0 0.0
  %691 = vmatprep.subr.mxu0 0.0
  %692 = vmatpush2.msra.mxu0 0.0
  %693 = vmatprep.subr.mxu0 0.0
  %694 = vmatpush2.msra.mxu0 0.0
  %695 = vmatprep.subr.mxu0 0.0
  %696 = vmatpush2.msra.mxu0 0.0
  %697 = vmatprep.subr.mxu0 0.0
  %698 = vmatpush2.msra.mxu0 0.0
  %699 = vmatprep.subr.mxu0 0.0
  %700 = vmatpush2.msra.mxu0 0.0
  %701 = vmatprep.mubr.f32.mxu0 0.0
  %702 = vmatmul.mubr.f32.gmra.mxu0 %v590
  %v703 = vpop.f32.mrf.mxu0
  %v704 = vadd.f32 %v511, %v703
  %v705 = vpop.f32.mrf.mxu0
  %706 = vmatprep.mubr.f32.mxu0 0.0
  %707 = vmatmul.mubr.f32.gmra.mxu0 %v593
  %v708 = vpop.f32.mrf.mxu0
  %v709 = vadd.f32 %v516, %v708
  %v710 = vpop.f32.mrf.mxu0
  %711 = vmatprep.mubr.f32.mxu0 0.0
  %712 = vmatmul.mubr.f32.gmra.mxu0 %v596
  %v713 = vpop.f32.mrf.mxu0
  %v714 = vadd.f32 %v521, %v713
  %v715 = vpop.f32.mrf.mxu0
  %716 = vmatprep.mubr.f32.mxu0 0.0
  %717 = vmatmul.mubr.f32.gmra.mxu0 %v599
  %v718 = vpop.f32.mrf.mxu0
  %v719 = vadd.f32 %v526, %v718
  %v720 = vpop.f32.mrf.mxu0
  %721 = vmatprep.mubr.f32.mxu0 0.0
  %722 = vmatmul.mubr.f32.gmra.mxu0 %v602
  %v723 = vpop.f32.mrf.mxu0
  %v724 = vadd.f32 %v531, %v723
  %v725 = vpop.f32.mrf.mxu0
  %726 = vmatprep.mubr.f32.mxu0 0.0
  %727 = vmatmul.mubr.f32.gmra.mxu0 %v605
  %v728 = vpop.f32.mrf.mxu0
  %v729 = vadd.f32 %v536, %v728
  %v730 = vpop.f32.mrf.mxu0
  %731 = vmatprep.mubr.f32.mxu0 0.0
  %732 = vmatmul.mubr.f32.gmra.mxu0 %v608
  %v733 = vpop.f32.mrf.mxu0
  %v734 = vadd.f32 %v541, %v733
  %v735 = vpop.f32.mrf.mxu0
  %736 = vmatprep.mubr.f32.mxu0 0.0
  %737 = vmatmul.mubr.f32.gmra.mxu0 %v611
  %v738 = vpop.f32.mrf.mxu0
  %v739 = vadd.f32 %v546, %v738
  %v740 = vpop.f32.mrf.mxu0
  %741 = vmatprep.mubr.f32.mxu0 0.0
  %742 = vmatmul.mubr.f32.gmra.mxu0 %v614
  %v743 = vpop.f32.mrf.mxu0
  %v744 = vadd.f32 %v551, %v743
  %v745 = vpop.f32.mrf.mxu0
  %746 = vmatprep.mubr.f32.mxu0 0.0
  %747 = vmatmul.mubr.f32.gmra.mxu0 %v617
  %v748 = vpop.f32.mrf.mxu0
  %v749 = vadd.f32 %v556, %v748
  %v750 = vpop.f32.mrf.mxu0
  %751 = vmatprep.mubr.f32.mxu0 0.0
  %752 = vmatmul.mubr.f32.gmra.mxu0 %v620
  %v753 = vpop.f32.mrf.mxu0
  %v754 = vadd.f32 %v561, %v753
  %v755 = vpop.f32.mrf.mxu0
  %756 = vmatprep.mubr.f32.mxu0 0.0
  %757 = vmatmul.mubr.f32.gmra.mxu0 %v623
  %v758 = vpop.f32.mrf.mxu0
  %v759 = vadd.f32 %v566, %v758
  %v760 = vpop.f32.mrf.mxu0
  %761 = vmatprep.mubr.f32.mxu0 0.0
  %762 = vmatmul.mubr.f32.gmra.mxu0 %v626
  %v763 = vpop.f32.mrf.mxu0
  %v764 = vadd.f32 %v571, %v763
  %v765 = vpop.f32.mrf.mxu0
  %766 = vmatprep.mubr.f32.mxu0 0.0
  %767 = vmatmul.mubr.f32.gmra.mxu0 %v629
  %v768 = vpop.f32.mrf.mxu0
  %v769 = vadd.f32 %v576, %v768
  %v770 = vpop.f32.mrf.mxu0
  %771 = vmatprep.mubr.f32.mxu0 0.0
  %772 = vmatmul.mubr.f32.gmra.mxu0 %v632
  %v773 = vpop.f32.mrf.mxu0
  %v774 = vadd.f32 %v581, %v773
  %v775 = vpop.f32.mrf.mxu0
  %776 = vmatprep.mubr.f32.mxu0 0.0
  %777 = vmatmul.mubr.f32.gmra.mxu0 %v635
  %v778 = vpop.f32.mrf.mxu0
  %v779 = vadd.f32 %v586, %v778
  %v780 = vpop.f32.mrf.mxu0
  %781 = vdwg.mxu0
  %v782 = vmax.f32 %v704, 0.0
  %v783 = vmax.f32 %v709, 0.0
  %v784 = vmax.f32 %v714, 0.0
  %v785 = vmax.f32 %v719, 0.0
  %v786 = vmax.f32 %v724, 0.0
  %v787 = vmax.f32 %v729, 0.0
  %v788 = vmax.f32 %v734, 0.0
  %v789 = vmax.f32 %v739, 0.0
  %v790 = vmax.f32 %v744, 0.0
  %v791 = vmax.f32 %v749, 0.0
  %v792 = vmax.f32 %v754, 0.0
  %v793 = vmax.f32 %v759, 0.0
  %v794 = vmax.f32 %v764, 0.0
  %v795 = vmax.f32 %v769, 0.0
  %v796 = vmax.f32 %v774, 0.0
  %v797 = vmax.f32 %v779, 0.0
  %v798 = vld [vmem:[%s8] sm:$0xff]
  %v799 = vld [vmem:[%s8 + $0x8] sm:$0xff]
  %v800 = vld [vmem:[%s8 + $0x10] sm:$0xff]
  %v801 = vld [vmem:[%s8 + $0x18] sm:$0xff]
  %v802 = vld [vmem:[%s8 + $0x20] sm:$0xff]
  %v803 = vld [vmem:[%s8 + $0x28] sm:$0xff]
  %v804 = vld [vmem:[%s8 + $0x30] sm:$0xff]
  %v805 = vld [vmem:[%s8 + $0x38] sm:$0xff]
  %v806 = vld [vmem:[%s9] sm:$0xff]
  %v807 = vld [vmem:[%s9 + $0x8] sm:$0xff]
  %v808 = vld [vmem:[%s9 + $0x10] sm:$0xff]
  %v809 = vld [vmem:[%s9 + $0x18] sm:$0xff]
  %v810 = vld [vmem:[%s9 + $0x20] sm:$0xff]
  %v811 = vld [vmem:[%s9 + $0x28] sm:$0xff]
  %v812 = vld [vmem:[%s9 + $0x30] sm:$0xff]
  %v813 = vld [vmem:[%s9 + $0x38] sm:$0xff]
  %815 = vset.pattern.permute.xlu0 0
  %816 = vperm.xlu0 %815, %v806
  %v817 = vpop.permute.xlu0 %816
  %820 = vset.pattern.permute.xlu0 0
  %821 = vperm.xlu0 %820, %v807
  %v822 = vpop.permute.xlu0 %821
  %825 = vset.pattern.permute.xlu0 0
  %826 = vperm.xlu0 %825, %v808
  %v827 = vpop.permute.xlu0 %826
  %830 = vset.pattern.permute.xlu0 0
  %831 = vperm.xlu0 %830, %v809
  %v832 = vpop.permute.xlu0 %831
  %835 = vset.pattern.permute.xlu0 0
  %836 = vperm.xlu0 %835, %v810
  %v837 = vpop.permute.xlu0 %836
  %840 = vset.pattern.permute.xlu0 0
  %841 = vperm.xlu0 %840, %v811
  %v842 = vpop.permute.xlu0 %841
  %845 = vset.pattern.permute.xlu0 0
  %846 = vperm.xlu0 %845, %v812
  %v847 = vpop.permute.xlu0 %846
  %850 = vset.pattern.permute.xlu0 0
  %851 = vperm.xlu0 %850, %v813
  %v852 = vpop.permute.xlu0 %851
  %854 = vmatprep.subr.mxu0 0.0
  %855 = vmatpush1.msra.mxu0 %v797
  %856 = vmatprep.subr.mxu0 0.0
  %857 = vmatpush1.msra.mxu0 %v796
  %858 = vmatprep.subr.mxu0 0.0
  %859 = vmatpush1.msra.mxu0 %v795
  %860 = vmatprep.subr.mxu0 0.0
  %861 = vmatpush1.msra.mxu0 %v794
  %862 = vmatprep.subr.mxu0 0.0
  %863 = vmatpush1.msra.mxu0 %v793
  %864 = vmatprep.subr.mxu0 0.0
  %865 = vmatpush1.msra.mxu0 %v792
  %866 = vmatprep.subr.mxu0 0.0
  %867 = vmatpush1.msra.mxu0 %v791
  %868 = vmatprep.subr.mxu0 0.0
  %869 = vmatpush1.msra.mxu0 %v790
  %870 = vmatprep.subr.mxu0 0.0
  %871 = vmatpush1.msra.mxu0 %v789
  %872 = vmatprep.subr.mxu0 0.0
  %873 = vmatpush1.msra.mxu0 %v788
  %874 = vmatprep.subr.mxu0 0.0
  %875 = vmatpush1.msra.mxu0 %v787
  %876 = vmatprep.subr.mxu0 0.0
  %877 = vmatpush1.msra.mxu0 %v786
  %878 = vmatprep.subr.mxu0 0.0
  %879 = vmatpush1.msra.mxu0 %v785
  %880 = vmatprep.subr.mxu0 0.0
  %881 = vmatpush1.msra.mxu0 %v784
  %882 = vmatprep.subr.mxu0 0.0
  %883 = vmatpush1.msra.mxu0 %v783
  %884 = vmatprep.subr.mxu0 0.0
  %885 = vmatpush1.msra.mxu0 %v782
  %886 = vmatprep.subr.mxu0 0.0
  %887 = vmatpush2.msra.mxu0 0.0
  %888 = vmatprep.subr.mxu0 0.0
  %889 = vmatpush2.msra.mxu0 0.0
  %890 = vmatprep.subr.mxu0 0.0
  %891 = vmatpush2.msra.mxu0 0.0
  %892 = vmatprep.subr.mxu0 0.0
  %893 = vmatpush2.msra.mxu0 0.0
  %894 = vmatprep.subr.mxu0 0.0
  %895 = vmatpush2.msra.mxu0 0.0
  %896 = vmatprep.subr.mxu0 0.0
  %897 = vmatpush2.msra.mxu0 0.0
  %898 = vmatprep.subr.mxu0 0.0
  %899 = vmatpush2.msra.mxu0 0.0
  %900 = vmatprep.subr.mxu0 0.0
  %901 = vmatpush2.msra.mxu0 0.0
  %902 = vmatprep.subr.mxu0 0.0
  %903 = vmatpush2.msra.mxu0 0.0
  %904 = vmatprep.subr.mxu0 0.0
  %905 = vmatpush2.msra.mxu0 0.0
  %906 = vmatprep.subr.mxu0 0.0
  %907 = vmatpush2.msra.mxu0 0.0
  %908 = vmatprep.subr.mxu0 0.0
  %909 = vmatpush2.msra.mxu0 0.0
  %910 = vmatprep.subr.mxu0 0.0
  %911 = vmatpush2.msra.mxu0 0.0
  %912 = vmatprep.subr.mxu0 0.0
  %913 = vmatpush2.msra.mxu0 0.0
  %914 = vmatprep.subr.mxu0 0.0
  %915 = vmatpush2.msra.mxu0 0.0
  %916 = vmatprep.subr.mxu0 0.0
  %917 = vmatpush2.msra.mxu0 0.0
  %918 = vmatprep.mubr.f32.mxu0 0.0
  %919 = vmatmul.mubr.f32.gmra.mxu0 %v798
  %v920 = vpop.f32.mrf.mxu0
  %v921 = vadd.f32 %v817, %v920
  %v922 = vpop.f32.mrf.mxu0
  %923 = vmatprep.mubr.f32.mxu0 0.0
  %924 = vmatmul.mubr.f32.gmra.mxu0 %v799
  %v925 = vpop.f32.mrf.mxu0
  %v926 = vadd.f32 %v822, %v925
  %v927 = vpop.f32.mrf.mxu0
  %928 = vmatprep.mubr.f32.mxu0 0.0
  %929 = vmatmul.mubr.f32.gmra.mxu0 %v800
  %v930 = vpop.f32.mrf.mxu0
  %v931 = vadd.f32 %v827, %v930
  %v932 = vpop.f32.mrf.mxu0
  %933 = vmatprep.mubr.f32.mxu0 0.0
  %934 = vmatmul.mubr.f32.gmra.mxu0 %v801
  %v935 = vpop.f32.mrf.mxu0
  %v936 = vadd.f32 %v832, %v935
  %v937 = vpop.f32.mrf.mxu0
  %938 = vmatprep.mubr.f32.mxu0 0.0
  %939 = vmatmul.mubr.f32.gmra.mxu0 %v802
  %v940 = vpop.f32.mrf.mxu0
  %v941 = vadd.f32 %v837, %v940
  %v942 = vpop.f32.mrf.mxu0
  %943 = vmatprep.mubr.f32.mxu0 0.0
  %944 = vmatmul.mubr.f32.gmra.mxu0 %v803
  %v945 = vpop.f32.mrf.mxu0
  %v946 = vadd.f32 %v842, %v945
  %v947 = vpop.f32.mrf.mxu0
  %948 = vmatprep.mubr.f32.mxu0 0.0
  %949 = vmatmul.mubr.f32.gmra.mxu0 %v804
  %v950 = vpop.f32.mrf.mxu0
  %v951 = vadd.f32 %v847, %v950
  %v952 = vpop.f32.mrf.mxu0
  %953 = vmatprep.mubr.f32.mxu0 0.0
  %954 = vmatmul.mubr.f32.gmra.mxu0 %v805
  %v955 = vpop.f32.mrf.mxu0
  %v956 = vadd.f32 %v852, %v955
  %v957 = vpop.f32.mrf.mxu0
  %958 = vdwg.mxu0
  %v959 = vmax.f32 %v921, 0.0
  %v960 = vmax.f32 %v926, 0.0
  %v961 = vmax.f32 %v931, 0.0
  %v962 = vmax.f32 %v936, 0.0
  %v963 = vmax.f32 %v941, 0.0
  %v964 = vmax.f32 %v946, 0.0
  %v965 = vmax.f32 %v951, 0.0
  %v966 = vmax.f32 %v956, 0.0
  %v967 = vld [vmem:[%s10] sm:$0xff]
  %v968 = vld [vmem:[%s10 + $0x8] sm:$0xff]
  %v969 = vld [vmem:[%s10 + $0x10] sm:$0xf]
  %v970 = vld [vmem:[%s11] sm:$0xff]
  %v971 = vld [vmem:[%s11 + $0x8] sm:$0xff]
  %v972 = vld [vmem:[%s11 + $0x10] sm:$0xf]
  %974 = vset.pattern.permute.xlu0 0
  %975 = vperm.xlu0 %974, %v970
  %v976 = vpop.permute.xlu0 %975
  %979 = vset.pattern.permute.xlu0 0
  %980 = vperm.xlu0 %979, %v971
  %v981 = vpop.permute.xlu0 %980
  %984 = vset.pattern.permute.xlu0 0
  %985 = vperm.xlu0 %984, %v972
  %v986 = vpop.permute.xlu0 %985
  %v989 = vsel %vm588, %v967, 0
  %v992 = vsel %vm588, %v968, 0
  %v995 = vsel %vm588, %v969, 0
  %997 = vmatprep.subr.mxu0 0.0
  %998 = vmatpush1.msra.mxu0 0.0
  %999 = vmatprep.subr.mxu0 0.0
  %1000 = vmatpush1.msra.mxu0 0.0
  %1001 = vmatprep.subr.mxu0 0.0
  %1002 = vmatpush1.msra.mxu0 0.0
  %1003 = vmatprep.subr.mxu0 0.0
  %1004 = vmatpush1.msra.mxu0 0.0
  %1005 = vmatprep.subr.mxu0 0.0
  %1006 = vmatpush1.msra.mxu0 0.0
  %1007 = vmatprep.subr.mxu0 0.0
  %1008 = vmatpush1.msra.mxu0 0.0
  %1009 = vmatprep.subr.mxu0 0.0
  %1010 = vmatpush1.msra.mxu0 0.0
  %1011 = vmatprep.subr.mxu0 0.0
  %1012 = vmatpush1.msra.mxu0 0.0
  %1013 = vmatprep.subr.mxu0 0.0
  %1014 = vmatpush1.msra.mxu0 %v966
  %1015 = vmatprep.subr.mxu0 0.0
  %1016 = vmatpush1.msra.mxu0 %v965
  %1017 = vmatprep.subr.mxu0 0.0
  %1018 = vmatpush1.msra.mxu0 %v964
  %1019 = vmatprep.subr.mxu0 0.0
  %1020 = vmatpush1.msra.mxu0 %v963
  %1021 = vmatprep.subr.mxu0 0.0
  %1022 = vmatpush1.msra.mxu0 %v962
  %1023 = vmatprep.subr.mxu0 0.0
  %1024 = vmatpush1.msra.mxu0 %v961
  %1025 = vmatprep.subr.mxu0 0.0
  %1026 = vmatpush1.msra.mxu0 %v960
  %1027 = vmatprep.subr.mxu0 0.0
  %1028 = vmatpush1.msra.mxu0 %v959
  %1029 = vmatprep.subr.mxu0 0.0
  %1030 = vmatpush2.msra.mxu0 0.0
  %1031 = vmatprep.subr.mxu0 0.0
  %1032 = vmatpush2.msra.mxu0 0.0
  %1033 = vmatprep.subr.mxu0 0.0
  %1034 = vmatpush2.msra.mxu0 0.0
  %1035 = vmatprep.subr.mxu0 0.0
  %1036 = vmatpush2.msra.mxu0 0.0
  %1037 = vmatprep.subr.mxu0 0.0
  %1038 = vmatpush2.msra.mxu0 0.0
  %1039 = vmatprep.subr.mxu0 0.0
  %1040 = vmatpush2.msra.mxu0 0.0
  %1041 = vmatprep.subr.mxu0 0.0
  %1042 = vmatpush2.msra.mxu0 0.0
  %1043 = vmatprep.subr.mxu0 0.0
  %1044 = vmatpush2.msra.mxu0 0.0
  %1045 = vmatprep.subr.mxu0 0.0
  %1046 = vmatpush2.msra.mxu0 0.0
  %1047 = vmatprep.subr.mxu0 0.0
  %1048 = vmatpush2.msra.mxu0 0.0
  %1049 = vmatprep.subr.mxu0 0.0
  %1050 = vmatpush2.msra.mxu0 0.0
  %1051 = vmatprep.subr.mxu0 0.0
  %1052 = vmatpush2.msra.mxu0 0.0
  %1053 = vmatprep.subr.mxu0 0.0
  %1054 = vmatpush2.msra.mxu0 0.0
  %1055 = vmatprep.subr.mxu0 0.0
  %1056 = vmatpush2.msra.mxu0 0.0
  %1057 = vmatprep.subr.mxu0 0.0
  %1058 = vmatpush2.msra.mxu0 0.0
  %1059 = vmatprep.subr.mxu0 0.0
  %1060 = vmatpush2.msra.mxu0 0.0
  %1061 = vmatprep.mubr.f32.mxu0 0.0
  %1062 = vmatmul.mubr.f32.gmra.mxu0 %v989
  %v1063 = vpop.f32.mrf.mxu0
  %v1064 = vadd.f32 %v976, %v1063
  %v1065 = vpop.f32.mrf.mxu0
  %1066 = vmatprep.mubr.f32.mxu0 0.0
  %1067 = vmatmul.mubr.f32.gmra.mxu0 %v992
  %v1068 = vpop.f32.mrf.mxu0
  %v1069 = vadd.f32 %v981, %v1068
  %v1070 = vpop.f32.mrf.mxu0
  %1071 = vmatprep.mubr.f32.mxu0 0.0
  %1072 = vmatmul.mubr.f32.gmra.mxu0 %v995
  %v1073 = vpop.f32.mrf.mxu0
  %v1074 = vadd.f32 %v986, %v1073
  %v1075 = vpop.f32.mrf.mxu0
  %1076 = vdwg.mxu0
  %v1077 = vmul.f32 %v282, %v1064
  %v1078 = vmul.f32 %v282, %v1069
  %v1079 = vmul.f32 %v282, %v1074
  %v1080 = vsub.f32 1.0, %v282
  %v1081 = vmul.f32 %v1080, %v223
  %v1082 = vmul.f32 %v1080, %v228
  %v1083 = vmul.f32 %v1080, %v233
  %v1084 = vadd.f32 %v1077, %v1081
  %v1085 = vadd.f32 %v1078, %v1082
  %v1086 = vadd.f32 %v1079, %v1083
  %1087 = vst [vmem:[%s14] sm:$0xff] %v1084
  %1088 = vst [vmem:[%s14 + $0x8] sm:$0xff] %v1085
  %1089 = vst [vmem:[%s14 + $0x10] sm:$0xf] %v1086
  // Predicated region
  $region58: #{drug_combination_predictor.1} parent=0 // pred_check
    _
  $region59: #{drug_combination_predictor.1} parent=0 // pred_check_branch
    %1091 = sbr.rel (0) target = $region61
  $region60: #{drug_combination_predictor.1} parent=0 // pred_region
    _
  $region61: #{drug_combination_predictor.1} parent=0 // pred_fallthru
    _
  // Predicated region
  $region62: #{drug_combination_predictor.1} parent=0 // pred_check
    _
  $region63: #{drug_combination_predictor.1} parent=0 // pred_check_branch
    %1093 = sbr.rel (0) target = $region65
  $region64: #{drug_combination_predictor.1} parent=0 // pred_region
    _
  $region65: #{drug_combination_predictor.1} parent=0 // pred_fallthru
    _

</llo_original>
